<compile_context>
chip_gen: v6e
topology: v6e:2x2x1
jax: 0.10.0
libtpu: 0.0.40
codegen_flags: <defaults>
</compile_context>

<pallas_src>
import jax
import jax.numpy as jnp
from jax.experimental import pallas as pl
from jax.experimental.pallas import tpu as pltpu


def _identity_kernel(x_ref, o_ref):
    # Whole-tile copy: load the VMEM block and store it back out (lane-dense vst).
    o_ref[...] = x_ref[...]


def _round_up(n, m):
    return ((n + m - 1) // m) * m


def _round_down(n, m):
    return (n // m) * m


# Sublane packing multiple by element size (bytes): f32 -> 8, bf16 -> 16, int8/fp8 -> 32.
_SUBLANE_MULT = {4: 8, 2: 16, 1: 32}


def _vmem_capacity_bytes():
    """Per-TensorCore VMEM capacity; conservative 64 MiB fallback (v7x-like)."""
    try:
        return int(pltpu.get_tpu_info().vmem_capacity_bytes)
    except Exception:
        return 64 << 20


def attention_decoder_forward(x, *, route_through_kernel=True, min_kernel_bytes=1 << 20):
    """Identity forward of AttentionDecoder.

    route_through_kernel=False (or tiny/ragged inputs) returns x directly — the
    truly optimal path for an identity op.  Otherwise the data is routed through
    a lane-dense, generation-aware Pallas copy kernel.
    """
    if not route_through_kernel:
        return x  # true identity: zero HBM traffic

    total = int(x.size)
    itemsize = int(jnp.dtype(x.dtype).itemsize)
    total_bytes = total * itemsize

    # Tiny inputs: pallas_call launch overhead dwarfs the copy; identity is exact.
    if total_bytes < min_kernel_bytes:
        return x

    # Pick a lane-dense last dim that divides the element count exactly, so the
    # kernel input is a pure reshape of the caller's buffer (no pad, no slice).
    lanes = next((c for c in (512, 256, 128) if total % c == 0), None)
    if lanes is None:
        # Ragged element count: a pad+slice path would ~3x the HBM traffic of an
        # identity op, so return the input directly (exactly correct).
        return x

    sub = _SUBLANE_MULT.get(itemsize, 8)
    n_rows = total // lanes

    vmem_bytes = _vmem_capacity_bytes()
    # v7x: 64 MiB VMEM per TC and 2 TCs per chip; v5e/v6e: 128 MiB VMEM, 1 TC.
    is_megacore = vmem_bytes < (96 << 20)
    tile_bytes_cap = (4 << 20) if is_megacore else (8 << 20)

    # Largest legal row tile within the per-generation block budget.
    row_cap = max(sub, _round_down(tile_bytes_cap // (lanes * itemsize), sub))

    if n_rows <= row_cap:
        row_tile = n_rows      # single block == full row extent (always legal)
    else:
        row_tile = row_cap     # multiple of the sublane count; last block may be ragged

    if is_megacore:
        # Keep both v7x TensorCores fed with >= 2 pipelined blocks each.
        target_steps = 4
        if pl.cdiv(n_rows, row_tile) < target_steps and n_rows >= target_steps * sub:
            row_tile = max(sub, _round_up(pl.cdiv(n_rows, target_steps), sub))

    grid = (pl.cdiv(n_rows, row_tile),)
    tile_bytes = row_tile * lanes * itemsize
    # 2 operands (in + out) x 2 pipeline buffers each, plus headroom; stay well
    # under every generation's physical VMEM (>= 64 MiB).
    vmem_limit = min(48 << 20, max(16 << 20, 4 * tile_bytes + (4 << 20)))

    x2d = x.reshape(n_rows, lanes)  # pure reshape: aliasable, no extra HBM copy

    out2d = pl.pallas_call(
        _identity_kernel,
        out_shape=jax.ShapeDtypeStruct((n_rows, lanes), x.dtype),
        grid_spec=pltpu.PrefetchScalarGridSpec(
            num_scalar_prefetch=0,
            grid=grid,
            in_specs=[pl.BlockSpec((row_tile, lanes), lambda i: (i, 0))],
            out_specs=pl.BlockSpec((row_tile, lanes), lambda i: (i, 0)),
        ),
        input_output_aliases={0: 0},  # reuse the caller's HBM buffer when donatable
        compiler_params=pltpu.CompilerParams(
            dimension_semantics=("parallel",),
            vmem_limit_bytes=vmem_limit,
        ),
        cost_estimate=pl.CostEstimate(
            flops=0, transcendentals=0, bytes_accessed=2 * total_bytes),
    )(x2d)

    return out2d.reshape(x.shape)


if __name__ == "__main__":
    # Small NCHW input consistent with a conv/seq2seq-style tensor.
    key = jax.random.PRNGKey(0)
    x = jax.random.normal(key, (2, 4, 16, 16), dtype=jnp.float32)

    # AttentionDecoder has no parameters (its forward is identity).
    # Force the Pallas copy path even though the tensor is tiny, to exercise the
    # kernel end-to-end on device.
    y = attention_decoder_forward(x, min_kernel_bytes=0)
    y = jax.block_until_ready(y)

    assert y.shape == x.shape
    assert y.dtype == x.dtype
    assert bool(jnp.all(y == x))

    # Default path for tiny inputs is the pure identity fast path (no kernel).
    y_fast = attention_decoder_forward(x)
    assert bool(jnp.all(y_fast == x))

    # A larger, kernel-path-by-default tensor (multi-block grid) for coverage.
    x_big = jax.random.normal(jax.random.PRNGKey(1), (8, 64, 64, 64), dtype=jnp.float32)
    y_big = jax.block_until_ready(attention_decoder_forward(x_big))
    assert bool(jnp.all(y_big == x_big))

    print("KERNEL_OK")
</pallas_src>

<mosaic_0001>
module attributes {stable_mosaic.version = 11 : i64} {
  func.func @_identity_kernel(%arg0: i32, %arg1: memref<4x512xf32, #tpu.memory_space<vmem>>, %arg2: memref<4x512xf32, #tpu.memory_space<vmem>>) attributes {dimension_semantics = [#tpu.dimension_semantics<parallel>], iteration_bounds = array<i64: 1>, scalar_prefetch = 0 : i64, scratch_operands = 0 : i64, tpu.core_type = #tpu.core_type<tc>, window_params = [{transform_indices = @transform_0, window_bounds = array<i64: 4, 512>}, {transform_indices = @transform_1, window_bounds = array<i64: 4, 512>}]} {
    %c0 = arith.constant 0 : index
    %c0_0 = arith.constant 0 : index
    %0 = vector.load %arg1[%c0, %c0_0] : memref<4x512xf32, #tpu.memory_space<vmem>>, vector<4x512xf32>
    %c0_1 = arith.constant 0 : index
    %c0_2 = arith.constant 0 : index
    %1 = vector.load %arg2[%c0_1, %c0_2] : memref<4x512xf32, #tpu.memory_space<vmem>>, vector<4x512xf32>
    tpu.vector_store %arg2[%c0_1, %c0_2], %0 {strides = array<i32>} : memref<4x512xf32, #tpu.memory_space<vmem>>, vector<4x512xf32>,
    return
  }
  func.func @transform_0(%arg0: i32) -> (i32, i32) {
    %c0_i32 = arith.constant 0 : i32
    %c0_i32_0 = arith.constant 0 : i32
    return %arg0, %c0_i32 : i32, i32
  }
  func.func @transform_1(%arg0: i32) -> (i32, i32) {
    %c0_i32 = arith.constant 0 : i32
    %c0_i32_0 = arith.constant 0 : i32
    return %arg0, %c0_i32 : i32, i32
  }
}

</mosaic_0001>

<llo_original>
// kernel: tpu_custom_call.1
$region0: #{tpu_custom_call.1}
  #allocation0 [shape = 'u32[]', space=smem, size = 0x4, offset = 0x4, fixed_abs, tag = 'smem constant byte address 0x4 - core index']
  #allocation1 [shape = 'u32[144,128]{1,0:T(1,128)}', space=vmem, size = 0x12000, scoped, tag = 'internal scratch']
  %s0 = inlined_call_operand.hbm [shape: f32[4,512], index: 0, kind: input, shape index: {}, may-alias: {0,1}]
  %s1 = inlined_call_operand.hbm [shape: f32[4,512], index: 1, kind: output, shape index: {}, may-alias: {0,1}]
  %s2 = sld [smem:[#allocation0]]
  $region18: #{tpu_custom_call.1} parent=0
    _
  %s4 = ssub.s32 1, %s2
  %s5 = scalar_select 0, %s4, %s2
  $region1: #{tpu_custom_call.1} parent=0
    #allocation2 [shape = 'u8[8192]{0}', space=vmem, size = 0x2000, scoped, tag = 'input window, operand 0, single buffered']
    #allocation3 [shape = 's32[1]{0}', space=sflag, size = 0x4, scoped, tag = 'scoped memory for tpu_custom_call.1']
    #allocation4 [shape = 's32[1]{0}', space=sflag, size = 0x4, scoped, tag = 'scoped memory for tpu_custom_call.1']
    #allocation5 [shape = 'u8[8192]{0}', space=vmem, size = 0x2000, scoped, tag = 'output window, operand 0, single buffered']
    %6 = vsyncpa [#allocation3], 0
    %7 = vsyncpa [#allocation4], 0
    // Predicated region
    $region2: #{tpu_custom_call.1} parent=1 // pred_check
      _
    $region3: #{tpu_custom_call.1} parent=1 // pred_check_branch
      %9 = sbr.rel (0) target = $region5
    $region4: #{tpu_custom_call.1} parent=1 // pred_region
      %s11 = ssub.s32 256, 256
      %12 = vsyncadd [#allocation3], %s11
      %s14 = sshll.u32 [#allocation2], 4
      %s15 = int_to_ptr.vmem [resolvable:$true] %s14
      %17 = dma.hbm_to_vmem [thread:$0]  %s0, 256, %s15, [#allocation3]
    $region5: #{tpu_custom_call.1} parent=1 // pred_fallthru
      _
    // Predicated region
    $region6: #{tpu_custom_call.1} parent=1 // pred_check
      _
    $region7: #{tpu_custom_call.1} parent=1 // pred_check_branch
      %19 = sbr.rel (0) target = $region9
    $region8: #{tpu_custom_call.1} parent=1 // pred_region
      %20 = dma.done [#allocation3], 256
    $region9: #{tpu_custom_call.1} parent=1 // pred_fallthru
      _
    %v21 = vld [vmem:[#allocation2] sm:$0xff]
    %v22 = vld [vmem:[#allocation2 + $0x8] sm:$0xff]
    %23 = vst [vmem:[#allocation5] sm:$0xff] %v21
    %24 = vst [vmem:[#allocation5 + $0x8] sm:$0xff] %v22
    // Predicated region
    $region10: #{tpu_custom_call.1} parent=1 // pred_check
      _
    $region11: #{tpu_custom_call.1} parent=1 // pred_check_branch
      %26 = sbr.rel (0) target = $region13
    $region12: #{tpu_custom_call.1} parent=1 // pred_region
      %s28 = ssub.s32 256, 256
      %29 = vsyncadd [#allocation4], %s28
      %s31 = sshll.u32 [#allocation5], 4
      %s32 = int_to_ptr.vmem [resolvable:$true] %s31
      %34 = dma.vmem_to_hbm [thread:$0]  %s32, 256, %s1, [#allocation4]
    $region13: #{tpu_custom_call.1} parent=1 // pred_fallthru
      _
    // Predicated region
    $region14: #{tpu_custom_call.1} parent=1 // pred_check
      _
    $region15: #{tpu_custom_call.1} parent=1 // pred_check_branch
      %36 = sbr.rel (0) target = $region17
    $region16: #{tpu_custom_call.1} parent=1 // pred_region
      %37 = dma.done [#allocation4], 256
    $region17: #{tpu_custom_call.1} parent=1 // pred_fallthru
      _
    %38 = vsyncpa [#allocation3], 1
    %39 = vsyncpa [#allocation4], 1

</llo_original>
